<compile_context>
chip_gen: v7x
topology: tpu7x:2x2x1
jax: 0.10.0
libtpu: 0.0.40
codegen_flags: <defaults>
</compile_context>

<pallas_src>
import functools

import jax
import jax.numpy as jnp
from jax.experimental import pallas as pl
from jax.experimental.pallas import tpu as pltpu

LANE = 128     # vreg lane width  (last-dim tiling unit)
SUBLANE = 8    # vreg sublane width (second-to-last tiling unit)


def _round_up(x, m):
    return (x + m - 1) // m * m


def mlp_kernel(x_ref, w1_ref, b1_ref, w2_ref, b2_ref, o_ref, *, use_bf16):
    """One (TB, n_in) batch tile: sigmoid(x @ W1 + b1) @ W2 + b2."""
    xv = x_ref[...].astype(jnp.float32)          # (TB, n_in)
    w1 = w1_ref[...].astype(jnp.float32)         # (n_in, Hp)
    n_in = w1.shape[0]

    # ---- layer 1 on the VPU: n_in rank-1 broadcast FMAs (K is tiny) ----
    h = xv[:, 0:1] * w1[0:1, :]                  # (TB,1)*(1,Hp) -> (TB,Hp)
    for k in range(1, n_in):                     # static unroll
        h = h + xv[:, k:k + 1] * w1[k:k + 1, :]
    h = h + b1_ref[...]                          # (TB,Hp) + (1,Hp)

    # ---- sigmoid: exp on the EUP, f32 math (v5e-safe) ----
    h = 1.0 / (1.0 + jnp.exp(-h))

    # ---- layer 2 on the MXU: K = Hp (lane-dense), f32 accumulation ----
    if use_bf16:
        out = jnp.dot(h.astype(jnp.bfloat16),
                      w2_ref[...].astype(jnp.bfloat16),
                      preferred_element_type=jnp.float32)
    else:
        out = jnp.dot(h, w2_ref[...].astype(jnp.float32),
                      preferred_element_type=jnp.float32)
    out = out + b2_ref[...]                      # (TB,Op) + (1,Op)
    o_ref[...] = out.astype(o_ref.dtype)


def net_forward(x, w1, b1, w2, b2, *, block_b=512, use_bf16=False):
    """Pallas forward pass of Net: sigmoid(x @ W1 + b1) @ W2 + b2.

    Weights are stored transposed w.r.t. PyTorch ((in, out) instead of
    (out, in)); biases may be 1-D or (1, features).
    """
    B, n_in = x.shape
    n_hidden = w1.shape[1]
    n_out = w2.shape[1]

    # Lane-dense padding of the feature dims (biggest measured lever:
    # last-dim < 128 forces masked partial stores and wastes MXU columns).
    Hp = _round_up(n_hidden, LANE)
    Op = _round_up(n_out, LANE)
    w1p = jnp.zeros((n_in, Hp), w1.dtype).at[:, :n_hidden].set(w1)
    b1p = jnp.zeros((1, Hp), b1.dtype).at[:, :n_hidden].set(b1.reshape(1, -1))
    # zero rows beyond n_hidden cancel the sigmoid(0)=0.5 of padded columns
    w2p = jnp.zeros((Hp, Op), w2.dtype).at[:n_hidden, :n_out].set(w2)
    b2p = jnp.zeros((1, Op), b2.dtype).at[:, :n_out].set(b2.reshape(1, -1))

    # Batch tiling: (8,128)-aligned tiles; tiny weights stay VMEM-resident.
    TB = min(_round_up(B, SUBLANE), _round_up(block_b, SUBLANE))
    Bp = _round_up(B, TB)
    xp = x if Bp == B else jnp.zeros((Bp, n_in), x.dtype).at[:B].set(x)

    out_p = pl.pallas_call(
        functools.partial(mlp_kernel, use_bf16=use_bf16),
        out_shape=jax.ShapeDtypeStruct((Bp, Op), x.dtype),
        grid=(Bp // TB,),
        in_specs=[
            pl.BlockSpec((TB, n_in), lambda i: (i, 0)),   # x: streamed per tile
            pl.BlockSpec((n_in, Hp), lambda i: (0, 0)),   # W1: resident
            pl.BlockSpec((1, Hp), lambda i: (0, 0)),      # b1: resident
            pl.BlockSpec((Hp, Op), lambda i: (0, 0)),     # W2: resident
            pl.BlockSpec((1, Op), lambda i: (0, 0)),      # b2: resident
        ],
        out_specs=pl.BlockSpec((TB, Op), lambda i: (i, 0)),
        compiler_params=pltpu.CompilerParams(
            dimension_semantics=("parallel",)),           # megacore over batch
    )(xp, w1p, b1p, w2p, b2p)

    # Strip batch / lane padding (wrapper-side layout plumbing only).
    return out_p[:B, :n_out]


def init_params(key, n_in, n_hidden, n_out, dtype=jnp.float32):
    """Mimics nn.Linear's U(-1/sqrt(fan_in), +1/sqrt(fan_in)) init."""
    k1, k2, k3, k4 = jax.random.split(key, 4)
    lim1 = 1.0 / jnp.sqrt(n_in)
    lim2 = 1.0 / jnp.sqrt(n_hidden)
    w1 = jax.random.uniform(k1, (n_in, n_hidden), dtype, -lim1, lim1)
    b1 = jax.random.uniform(k2, (1, n_hidden), dtype, -lim1, lim1)
    w2 = jax.random.uniform(k3, (n_hidden, n_out), dtype, -lim2, lim2)
    b2 = jax.random.uniform(k4, (1, n_out), dtype, -lim2, lim2)
    return w1, b1, w2, b2


def _ref_forward(x, w1, b1, w2, b2):
    h = x @ w1 + b1
    h = 1.0 / (1.0 + jnp.exp(-h))
    return h @ w2 + b2


if __name__ == "__main__":
    # Small shapes consistent with the sine-fitting MLP.
    batch, n_in, n_hidden, n_out = 8, 4, 32, 4
    key = jax.random.PRNGKey(0)
    kx, kp = jax.random.split(key)
    x = jax.random.normal(kx, (batch, n_in), jnp.float32)
    w1, b1, w2, b2 = init_params(kp, n_in, n_hidden, n_out)

    out = net_forward(x, w1, b1, w2, b2)
    jax.block_until_ready(out)
    ref = _ref_forward(x, w1, b1, w2, b2)
    assert out.shape == (batch, n_out)
    assert jnp.allclose(out, ref, atol=1e-5, rtol=1e-5)

    # Exercise the ragged-batch / multi-tile grid path (TB=16 -> 3 grid steps).
    x2 = jax.random.normal(jax.random.PRNGKey(1), (37, n_in), jnp.float32)
    out2 = net_forward(x2, w1, b1, w2, b2, block_b=16)
    jax.block_until_ready(out2)
    ref2 = _ref_forward(x2, w1, b1, w2, b2)
    assert out2.shape == (37, n_out)
    assert jnp.allclose(out2, ref2, atol=1e-5, rtol=1e-5)

    print("KERNEL_OK")
</pallas_src>

<mosaic_0001>
module attributes {stable_mosaic.version = 11 : i64} {
  func.func @mlp_kernel(%arg0: i32, %arg1: memref<8x4xf32, #tpu.memory_space<vmem>>, %arg2: memref<4x128xf32, #tpu.memory_space<vmem>>, %arg3: memref<1x128xf32, #tpu.memory_space<vmem>>, %arg4: memref<128x128xf32, #tpu.memory_space<vmem>>, %arg5: memref<1x128xf32, #tpu.memory_space<vmem>>, %arg6: memref<8x128xf32, #tpu.memory_space<vmem>>) attributes {dimension_semantics = [#tpu.dimension_semantics<parallel>], iteration_bounds = array<i64: 1>, scalar_prefetch = 0 : i64, scratch_operands = 0 : i64, tpu.core_type = #tpu.core_type<tc>, window_params = [{transform_indices = @transform_0, window_bounds = array<i64: 8, 4>}, {pipeline_mode = #tpu.pipeline_mode<synchronous>, transform_indices = @transform_1, window_bounds = array<i64: 4, 128>}, {pipeline_mode = #tpu.pipeline_mode<synchronous>, transform_indices = @transform_2, window_bounds = array<i64: 1, 128>}, {pipeline_mode = #tpu.pipeline_mode<synchronous>, transform_indices = @transform_3, window_bounds = array<i64: 128, 128>}, {pipeline_mode = #tpu.pipeline_mode<synchronous>, transform_indices = @transform_4, window_bounds = array<i64: 1, 128>}, {transform_indices = @transform_5, window_bounds = array<i64: 8, 128>}]} {
    %c0 = arith.constant 0 : index
    %c0_0 = arith.constant 0 : index
    %0 = vector.load %arg1[%c0, %c0_0] : memref<8x4xf32, #tpu.memory_space<vmem>>, vector<8x4xf32>
    %c0_1 = arith.constant 0 : index
    %c0_2 = arith.constant 0 : index
    %1 = vector.load %arg2[%c0_1, %c0_2] : memref<4x128xf32, #tpu.memory_space<vmem>>, vector<4x128xf32>
    %2 = vector.extract_strided_slice %0 {offsets = [0, 0], sizes = [8, 1], strides = [1, 1]} : vector<8x4xf32> to vector<8x1xf32>
    %3 = vector.extract_strided_slice %1 {offsets = [0, 0], sizes = [1, 128], strides = [1, 1]} : vector<4x128xf32> to vector<1x128xf32>
    %4 = vector.broadcast %2 : vector<8x1xf32> to vector<8x128xf32>
    %5 = vector.broadcast %3 : vector<1x128xf32> to vector<8x128xf32>
    %6 = arith.mulf %4, %5 : vector<8x128xf32>
    %7 = vector.extract_strided_slice %0 {offsets = [0, 1], sizes = [8, 1], strides = [1, 1]} : vector<8x4xf32> to vector<8x1xf32>
    %8 = vector.extract_strided_slice %1 {offsets = [1, 0], sizes = [1, 128], strides = [1, 1]} : vector<4x128xf32> to vector<1x128xf32>
    %9 = vector.broadcast %7 : vector<8x1xf32> to vector<8x128xf32>
    %10 = vector.broadcast %8 : vector<1x128xf32> to vector<8x128xf32>
    %11 = arith.mulf %9, %10 : vector<8x128xf32>
    %12 = arith.addf %6, %11 : vector<8x128xf32>
    %13 = vector.extract_strided_slice %0 {offsets = [0, 2], sizes = [8, 1], strides = [1, 1]} : vector<8x4xf32> to vector<8x1xf32>
    %14 = vector.extract_strided_slice %1 {offsets = [2, 0], sizes = [1, 128], strides = [1, 1]} : vector<4x128xf32> to vector<1x128xf32>
    %15 = vector.broadcast %13 : vector<8x1xf32> to vector<8x128xf32>
    %16 = vector.broadcast %14 : vector<1x128xf32> to vector<8x128xf32>
    %17 = arith.mulf %15, %16 : vector<8x128xf32>
    %18 = arith.addf %12, %17 : vector<8x128xf32>
    %19 = vector.extract_strided_slice %0 {offsets = [0, 3], sizes = [8, 1], strides = [1, 1]} : vector<8x4xf32> to vector<8x1xf32>
    %20 = vector.extract_strided_slice %1 {offsets = [3, 0], sizes = [1, 128], strides = [1, 1]} : vector<4x128xf32> to vector<1x128xf32>
    %21 = vector.broadcast %19 : vector<8x1xf32> to vector<8x128xf32>
    %22 = vector.broadcast %20 : vector<1x128xf32> to vector<8x128xf32>
    %23 = arith.mulf %21, %22 : vector<8x128xf32>
    %24 = arith.addf %18, %23 : vector<8x128xf32>
    %c0_3 = arith.constant 0 : index
    %c0_4 = arith.constant 0 : index
    %25 = vector.load %arg3[%c0_3, %c0_4] : memref<1x128xf32, #tpu.memory_space<vmem>>, vector<1x128xf32>
    %26 = vector.broadcast %25 : vector<1x128xf32> to vector<8x128xf32>
    %27 = arith.addf %24, %26 : vector<8x128xf32>
    %cst = arith.constant 0.000000e+00 : f32
    %28 = vector.broadcast %cst : f32 to vector<8x128xf32>
    %29 = arith.subf %28, %27 : vector<8x128xf32>
    %30 = math.exp %29 : vector<8x128xf32>
    %cst_5 = arith.constant 1.000000e+00 : f32
    %31 = vector.broadcast %cst_5 : f32 to vector<8x128xf32>
    %32 = arith.addf %31, %30 : vector<8x128xf32>
    %cst_6 = arith.constant 1.000000e+00 : f32
    %33 = vector.broadcast %cst_6 : f32 to vector<8x128xf32>
    %34 = arith.divf %33, %32 : vector<8x128xf32>
    %c0_7 = arith.constant 0 : index
    %c0_8 = arith.constant 0 : index
    %35 = vector.load %arg4[%c0_7, %c0_8] : memref<128x128xf32, #tpu.memory_space<vmem>>, vector<128x128xf32>
    %cst_9 = arith.constant dense<0.000000e+00> : vector<8x128xf32>
    %36 = tpu.matmul %34, %35, %cst_9 {dimension_numbers = #tpu.dot_dimension_numbers<[1], [0], [0], [1], [0, 0, 1, 1], [], []>} : vector<8x128xf32>, vector<128x128xf32>, vector<8x128xf32> -> vector<8x128xf32>
    %c0_10 = arith.constant 0 : index
    %c0_11 = arith.constant 0 : index
    %37 = vector.load %arg5[%c0_10, %c0_11] : memref<1x128xf32, #tpu.memory_space<vmem>>, vector<1x128xf32>
    %38 = vector.broadcast %37 : vector<1x128xf32> to vector<8x128xf32>
    %39 = arith.addf %36, %38 : vector<8x128xf32>
    %c0_12 = arith.constant 0 : index
    %c0_13 = arith.constant 0 : index
    %40 = vector.load %arg6[%c0_12, %c0_13] : memref<8x128xf32, #tpu.memory_space<vmem>>, vector<8x128xf32>
    tpu.vector_store %arg6[%c0_12, %c0_13], %39 {strides = array<i32>} : memref<8x128xf32, #tpu.memory_space<vmem>>, vector<8x128xf32>,
    return
  }
  func.func @transform_0(%arg0: i32) -> (i32, i32) {
    %c0_i32 = arith.constant 0 : i32
    %c0_i32_0 = arith.constant 0 : i32
    return %arg0, %c0_i32 : i32, i32
  }
  func.func @transform_1(%arg0: i32) -> (i32, i32) {
    %c0_i32 = arith.constant 0 : i32
    %c0_i32_0 = arith.constant 0 : i32
    %c0_i32_1 = arith.constant 0 : i32
    return %c0_i32, %c0_i32_0 : i32, i32
  }
  func.func @transform_2(%arg0: i32) -> (i32, i32) {
    %c0_i32 = arith.constant 0 : i32
    %c0_i32_0 = arith.constant 0 : i32
    %c0_i32_1 = arith.constant 0 : i32
    return %c0_i32, %c0_i32_0 : i32, i32
  }
  func.func @transform_3(%arg0: i32) -> (i32, i32) {
    %c0_i32 = arith.constant 0 : i32
    %c0_i32_0 = arith.constant 0 : i32
    %c0_i32_1 = arith.constant 0 : i32
    return %c0_i32, %c0_i32_0 : i32, i32
  }
  func.func @transform_4(%arg0: i32) -> (i32, i32) {
    %c0_i32 = arith.constant 0 : i32
    %c0_i32_0 = arith.constant 0 : i32
    %c0_i32_1 = arith.constant 0 : i32
    return %c0_i32, %c0_i32_0 : i32, i32
  }
  func.func @transform_5(%arg0: i32) -> (i32, i32) {
    %c0_i32 = arith.constant 0 : i32
    %c0_i32_0 = arith.constant 0 : i32
    return %arg0, %c0_i32 : i32, i32
  }
}

</mosaic_0001>

<llo_original>
// kernel: tpu_custom_call.1
$region0: #{tpu_custom_call.1}
  #allocation0 [shape = 'u32[]', space=smem, size = 0x4, offset = 0x4, fixed_abs, tag = 'smem constant byte address 0x4 - core index']
  #allocation1 [shape = 'u32[144,128]{1,0:T(1,128)}', space=vmem, size = 0x12000, scoped, tag = 'internal scratch']
  %s0 = inlined_call_operand.vmem [shape: f32[8,4], index: 0, kind: input, shape index: {}]
  %s1 = inlined_call_operand.vmem [shape: f32[4,128], index: 1, kind: input, shape index: {}]
  %s2 = inlined_call_operand.vmem [shape: f32[1,128], index: 2, kind: input, shape index: {}]
  %s3 = inlined_call_operand.hbm [shape: f32[128,128], index: 3, kind: input, shape index: {}]
  %s4 = inlined_call_operand.vmem [shape: f32[1,128], index: 4, kind: input, shape index: {}]
  %s5 = inlined_call_operand.hbm [shape: f32[8,128], index: 5, kind: output, shape index: {}]
  %s6 = sld [smem:[#allocation0]]
  $region34: #{tpu_custom_call.1} parent=0
    _
  %s8 = ssub.s32 1, %s6
  %s9 = scalar_select 0, %s8, %s6
  $region1: #{tpu_custom_call.1} parent=0
    #allocation2 [shape = 'u8[65536]{0}', space=vmem, size = 0x10000, scoped, tag = 'input window, operand 3, single buffered']
    #allocation3 [shape = 's32[1]{0}', space=sflag, size = 0x4, scoped, tag = 'scoped memory for tpu_custom_call.1']
    #allocation4 [shape = 's32[1]{0}', space=sflag, size = 0x4, scoped, tag = 'scoped memory for tpu_custom_call.1']
    #allocation5 [shape = 'u8[4096]{0}', space=vmem, size = 0x1000, scoped, tag = 'output window, operand 0, single buffered']
    %10 = vsyncpa [#allocation3], 0
    %11 = vsyncpa [#allocation4], 0
    // Predicated region
    $region2: #{tpu_custom_call.1} parent=1 // pred_check
      _
    $region3: #{tpu_custom_call.1} parent=1 // pred_check_branch
      %13 = sbr.rel (0) target = $region5
    $region4: #{tpu_custom_call.1} parent=1 // pred_region
      _
    $region5: #{tpu_custom_call.1} parent=1 // pred_fallthru
      _
    // Predicated region
    $region6: #{tpu_custom_call.1} parent=1 // pred_check
      _
    $region7: #{tpu_custom_call.1} parent=1 // pred_check_branch
      %15 = sbr.rel (0) target = $region9
    $region8: #{tpu_custom_call.1} parent=1 // pred_region
      _
    $region9: #{tpu_custom_call.1} parent=1 // pred_fallthru
      _
    // Predicated region
    $region10: #{tpu_custom_call.1} parent=1 // pred_check
      _
    $region11: #{tpu_custom_call.1} parent=1 // pred_check_branch
      %17 = sbr.rel (0) target = $region13
    $region12: #{tpu_custom_call.1} parent=1 // pred_region
      _
    $region13: #{tpu_custom_call.1} parent=1 // pred_fallthru
      _
    // Predicated region
    $region14: #{tpu_custom_call.1} parent=1 // pred_check
      _
    $region15: #{tpu_custom_call.1} parent=1 // pred_check_branch
      %19 = sbr.rel (0) target = $region17
    $region16: #{tpu_custom_call.1} parent=1 // pred_region
      %s21 = ssub.s32 2048, 2048
      %22 = vsyncadd [#allocation3], %s21
      %s23 = sshll.u32 [#allocation2], 4
      %s24 = int_to_ptr.vmem [resolvable:$true] %s23
      %29 = dma.hbm_to_vmem [thread:$0]  %s3, 2048, %s24, [#allocation3], 128, 128, 8
    $region17: #{tpu_custom_call.1} parent=1 // pred_fallthru
      _
    // Predicated region
    $region18: #{tpu_custom_call.1} parent=1 // pred_check
      _
    $region19: #{tpu_custom_call.1} parent=1 // pred_check_branch
      %31 = sbr.rel (0) target = $region21
    $region20: #{tpu_custom_call.1} parent=1 // pred_region
      _
    $region21: #{tpu_custom_call.1} parent=1 // pred_fallthru
      _
    // Predicated region
    $region22: #{tpu_custom_call.1} parent=1 // pred_check
      _
    $region23: #{tpu_custom_call.1} parent=1 // pred_check_branch
      %33 = sbr.rel (0) target = $region25
    $region24: #{tpu_custom_call.1} parent=1 // pred_region
      %34 = dma.done [#allocation3], 2048
    $region25: #{tpu_custom_call.1} parent=1 // pred_fallthru
      _
    %v35 = vld [vmem:[%s0] sm:$0xff]
    %v36 = vld [vmem:[%s1] sm:$0xf]
    %38 = vset.pattern.permute.xlu0 0
    %39 = vperm.xlu0 %38, %v35
    %v40 = vpop.permute.xlu0 %39
    %v42 = vlaneseq
    %v43 = vshrl.u32 %v42, 7
    %v44 = vsub.s32 0, %v43
    %v45 = vrot.slane %v36, %v44
    %v46 = vmul.f32 %v40, %v45
    %47 = vset.pattern.permute.xlu0 1
    %48 = vperm.xlu0 %47, %v35
    %v49 = vpop.permute.xlu0 %48
    %v51 = vlaneseq
    %v52 = vshrl.u32 %v51, 7
    %v53 = vsub.s32 1, %v52
    %v54 = vrot.slane %v36, %v53
    %v55 = vmul.f32 %v49, %v54
    %v56 = vadd.f32 %v46, %v55
    %57 = vset.pattern.permute.xlu0 2
    %58 = vperm.xlu0 %57, %v35
    %v59 = vpop.permute.xlu0 %58
    %v61 = vlaneseq
    %v62 = vshrl.u32 %v61, 7
    %v63 = vsub.s32 2, %v62
    %v64 = vrot.slane %v36, %v63
    %v65 = vmul.f32 %v59, %v64
    %v66 = vadd.f32 %v56, %v65
    %67 = vset.pattern.permute.xlu0 3
    %68 = vperm.xlu0 %67, %v35
    %v69 = vpop.permute.xlu0 %68
    %v71 = vlaneseq
    %v72 = vshrl.u32 %v71, 7
    %v73 = vsub.s32 3, %v72
    %v74 = vrot.slane %v36, %v73
    %v75 = vmul.f32 %v69, %v74
    %v76 = vadd.f32 %v66, %v75
    %v77 = vld [vmem:[%s2] sm:$0x1]
    %v79 = vlaneseq
    %v80 = vshrl.u32 %v79, 7
    %v81 = vsub.s32 0, %v80
    %v82 = vrot.slane %v77, %v81
    %v84 = vadd.f32 %v76, %v82
    %v85 = vsub.f32 0.0, %v84
    %v86 = vmul.f32 %v85, 1.442695
    %v87 = vpow.pop %v86
    %v88 = vadd.f32 %v87, 1.0
    %v89 = vrcp.pop %v88
    %v90 = vmul.f32 1.0, %v89
    %v91 = vld [vmem:[#allocation2] sm:$0xff]
    %v92 = vld [vmem:[#allocation2 + $0x8] sm:$0xff]
    %v93 = vld [vmem:[#allocation2 + $0x10] sm:$0xff]
    %v94 = vld [vmem:[#allocation2 + $0x18] sm:$0xff]
    %v95 = vld [vmem:[#allocation2 + $0x20] sm:$0xff]
    %v96 = vld [vmem:[#allocation2 + $0x28] sm:$0xff]
    %v97 = vld [vmem:[#allocation2 + $0x30] sm:$0xff]
    %v98 = vld [vmem:[#allocation2 + $0x38] sm:$0xff]
    %v99 = vld [vmem:[#allocation2 + $0x40] sm:$0xff]
    %v100 = vld [vmem:[#allocation2 + $0x48] sm:$0xff]
    %v101 = vld [vmem:[#allocation2 + $0x50] sm:$0xff]
    %v102 = vld [vmem:[#allocation2 + $0x58] sm:$0xff]
    %v103 = vld [vmem:[#allocation2 + $0x60] sm:$0xff]
    %v104 = vld [vmem:[#allocation2 + $0x68] sm:$0xff]
    %v105 = vld [vmem:[#allocation2 + $0x70] sm:$0xff]
    %v106 = vld [vmem:[#allocation2 + $0x78] sm:$0xff]
    %v107 = vld [vmem:[%s4] sm:$0x1]
    %v109 = vlaneseq
    %v110 = vshrl.u32 %v109, 7
    %v111 = vsub.s32 0, %v110
    %v112 = vrot.slane %v107, %v111
    %114 = vmatprep.subr.mxu0 0.0
    %115 = vmatpush1.msra.mxu0 %v91
    %116 = vmatprep.subr.mxu0 0.0
    %117 = vmatpush1.msra.mxu0 %v92
    %118 = vmatprep.subr.mxu0 0.0
    %119 = vmatpush1.msra.mxu0 %v93
    %120 = vmatprep.subr.mxu0 0.0
    %121 = vmatpush1.msra.mxu0 %v94
    %122 = vmatprep.subr.mxu0 0.0
    %123 = vmatpush1.msra.mxu0 %v95
    %124 = vmatprep.subr.mxu0 0.0
    %125 = vmatpush1.msra.mxu0 %v96
    %126 = vmatprep.subr.mxu0 0.0
    %127 = vmatpush1.msra.mxu0 %v97
    %128 = vmatprep.subr.mxu0 0.0
    %129 = vmatpush1.msra.mxu0 %v98
    %130 = vmatprep.subr.mxu0 0.0
    %131 = vmatpush1.msra.mxu0 %v99
    %132 = vmatprep.subr.mxu0 0.0
    %133 = vmatpush1.msra.mxu0 %v100
    %134 = vmatprep.subr.mxu0 0.0
    %135 = vmatpush1.msra.mxu0 %v101
    %136 = vmatprep.subr.mxu0 0.0
    %137 = vmatpush1.msra.mxu0 %v102
    %138 = vmatprep.subr.mxu0 0.0
    %139 = vmatpush1.msra.mxu0 %v103
    %140 = vmatprep.subr.mxu0 0.0
    %141 = vmatpush1.msra.mxu0 %v104
    %142 = vmatprep.subr.mxu0 0.0
    %143 = vmatpush1.msra.mxu0 %v105
    %144 = vmatprep.subr.mxu0 0.0
    %145 = vmatpush1.msra.mxu0 %v106
    %146 = vmatprep.subr.mxu0 0.0
    %147 = vmatpush1.msra.mxu0 0.0
    %148 = vmatprep.subr.mxu0 0.0
    %149 = vmatpush1.msra.mxu0 0.0
    %150 = vmatprep.subr.mxu0 0.0
    %151 = vmatpush1.msra.mxu0 0.0
    %152 = vmatprep.subr.mxu0 0.0
    %153 = vmatpush1.msra.mxu0 0.0
    %154 = vmatprep.subr.mxu0 0.0
    %155 = vmatpush1.msra.mxu0 0.0
    %156 = vmatprep.subr.mxu0 0.0
    %157 = vmatpush1.msra.mxu0 0.0
    %158 = vmatprep.subr.mxu0 0.0
    %159 = vmatpush1.msra.mxu0 0.0
    %160 = vmatprep.subr.mxu0 0.0
    %161 = vmatpush1.msra.mxu0 0.0
    %162 = vmatprep.subr.mxu0 0.0
    %163 = vmatpush1.msra.mxu0 0.0
    %164 = vmatprep.subr.mxu0 0.0
    %165 = vmatpush1.msra.mxu0 0.0
    %166 = vmatprep.subr.mxu0 0.0
    %167 = vmatpush1.msra.mxu0 0.0
    %168 = vmatprep.subr.mxu0 0.0
    %169 = vmatpush1.msra.mxu0 0.0
    %170 = vmatprep.subr.mxu0 0.0
    %171 = vmatpush1.msra.mxu0 0.0
    %172 = vmatprep.subr.mxu0 0.0
    %173 = vmatpush1.msra.mxu0 0.0
    %174 = vmatprep.subr.mxu0 0.0
    %175 = vmatpush1.msra.mxu0 0.0
    %176 = vmatprep.subr.mxu0 0.0
    %177 = vmatpush1.msra.mxu0 0.0
    %178 = vmatprep.mubr.f32.mxu0 0.0
    %179 = vmatmul.mubr.f32.gmra.mrb[0].mxu0 %v90
    %v180 = vpop.f32.mrb[0].mxu0
    %v181 = vadd.f32 %v112, %v180
    %v182 = vpop.f32.mrb[0].mxu0
    %183 = vdwg.mxu0
    %184 = vst [vmem:[#allocation5] sm:$0xff] %v181
    // Predicated region
    $region26: #{tpu_custom_call.1} parent=1 // pred_check
      _
    $region27: #{tpu_custom_call.1} parent=1 // pred_check_branch
      %186 = sbr.rel (0) target = $region29
    $region28: #{tpu_custom_call.1} parent=1 // pred_region
      %s188 = ssub.s32 128, 128
      %189 = vsyncadd [#allocation4], %s188
      %s191 = sshll.u32 [#allocation5], 4
      %s192 = int_to_ptr.vmem [resolvable:$true] %s191
      %194 = dma.vmem_to_hbm [thread:$0]  %s192, 128, %s5, [#allocation4]
    $region29: #{tpu_custom_call.1} parent=1 // pred_fallthru
      _
    // Predicated region
    $region30: #{tpu_custom_call.1} parent=1 // pred_check
      _
    $region31: #{tpu_custom_call.1} parent=1 // pred_check_branch
      %196 = sbr.rel (0) target = $region33
    $region32: #{tpu_custom_call.1} parent=1 // pred_region
      %197 = dma.done [#allocation4], 128
    $region33: #{tpu_custom_call.1} parent=1 // pred_fallthru
      _
    %198 = vsyncpa [#allocation3], 1
    %199 = vsyncpa [#allocation4], 1

</llo_original>
